<compile_context>
chip_gen: v5e
topology: v5e:2x2
jax: 0.10.0
libtpu: 0.0.40
codegen_flags: <defaults>
</compile_context>

<pallas_src>
import functools
import math

import jax
import jax.numpy as jnp
from jax.experimental import pallas as pl
from jax.experimental.pallas import tpu as pltpu


def _round_up(x, m):
    return ((x + m - 1) // m) * m


def _dueling_kernel(x_ref,
                    w1_ref, b1_ref,
                    wa2_ref, ba2_ref, wa3_ref, ba3_ref,
                    wv2_ref, bv2_ref, wv3_ref, bv3_ref,
                    q_ref, asum_ref,
                    *, h1, tb, b_valid, a_valid):
    x = x_ref[...]                                                    # (TB, S) f32

    # ---- fused layer 1 of both heads: one (S, 2*H1) bf16 matmul, f32 accum ----
    z = jnp.dot(x.astype(jnp.bfloat16), w1_ref[...],
                preferred_element_type=jnp.float32) + b1_ref[...]
    z = jnp.maximum(z, 0.0)
    h = z[:, :h1]                                                     # advantage branch
    g = z[:, h1:]                                                     # value branch

    # ---- layer 2 of both heads (both MXU pushes issued back to back) ----
    h2 = jnp.dot(h.astype(jnp.bfloat16), wa2_ref[...],
                 preferred_element_type=jnp.float32)
    g2 = jnp.dot(g.astype(jnp.bfloat16), wv2_ref[...],
                 preferred_element_type=jnp.float32)
    h2 = jnp.maximum(h2 + ba2_ref[...], 0.0)
    g2 = jnp.maximum(g2 + bv2_ref[...], 0.0)

    # ---- advantage output layer (MXU); output columns padded to a full 128 lanes ----
    adv = jnp.dot(h2.astype(jnp.bfloat16), wa3_ref[...],
                  preferred_element_type=jnp.float32) + ba3_ref[...]  # (TB, A_pad)

    # ---- value output layer (N=1): VPU multiply + row reduce, no MXU ----
    val = jnp.sum(g2 * wv3_ref[...], axis=-1, keepdims=True) + bv3_ref[...]  # (TB, 1)

    # ---- per-tile output: adv + value (global-mean correction applied in wrapper) ----
    # Lane-dense (TB, 128) store; pad columns are sliced off in the wrapper.
    q_ref[...] = (adv + val).astype(q_ref.dtype)

    # ---- partial sum of advantage over VALID rows (< B) and VALID columns (< A) ----
    row0 = pl.program_id(0) * tb
    rows = row0 + jax.lax.broadcasted_iota(jnp.int32, adv.shape, 0)
    cols = jax.lax.broadcasted_iota(jnp.int32, adv.shape, 1)
    mask = (rows < b_valid) & (cols < a_valid)
    adv_sum = jnp.sum(jnp.where(mask, adv, 0.0))
    asum_ref[...] = jnp.broadcast_to(adv_sum, asum_ref.shape)


def pack_params(p):
    """Pre-pack / cast params once: fuse layer-1 of both heads, bf16 heavy weights,
    zero-pad the advantage output layer to 128 lane-dense columns, reshape the value
    output column to a (1, H2) row for the VPU reduce."""
    H1 = p["wa2"].shape[0]
    H2 = p["wa2"].shape[1]
    # Lane-tile alignment guard: the z[:, :H1] split (and the h2/g2 handling) is only
    # free when the split point sits on a 128-lane boundary.
    assert H1 % 128 == 0 and H2 % 128 == 0, "hidden sizes must be multiples of 128"
    A = p["wa3"].shape[1]
    A_pad = _round_up(A, 128)
    wa3 = jnp.pad(p["wa3"], ((0, 0), (0, A_pad - A)))   # pad columns are exactly zero
    ba3 = jnp.pad(p["ba3"], ((0, 0), (0, A_pad - A)))   # pad bias is exactly zero
    return {
        "w1":  jnp.concatenate([p["wa1"], p["wv1"]], axis=1).astype(jnp.bfloat16),
        "b1":  jnp.concatenate([p["ba1"], p["bv1"]], axis=1).astype(jnp.float32),
        "wa2": p["wa2"].astype(jnp.bfloat16),
        "ba2": p["ba2"].astype(jnp.float32),
        "wa3": wa3.astype(jnp.bfloat16),
        "ba3": ba3.astype(jnp.float32),
        "wv2": p["wv2"].astype(jnp.bfloat16),
        "bv2": p["bv2"].astype(jnp.float32),
        "wv3": p["wv3"].reshape(1, -1).astype(jnp.float32),
        "bv3": p["bv3"].reshape(1, 1).astype(jnp.float32),
        "action_size": int(A),
    }


def dueling_forward(state, pk, *, tile_b=1024):
    """state: (B, state_size) f32; pk: output of pack_params().

    tile_b: max rows per batch tile. 1024 is a good default everywhere (v5e/v6e can
    use up to 2048; keep <=1024 on v7x because of its 64 MiB per-TC VMEM).
    """
    assert tile_b % 8 == 0 and tile_b >= 8
    B, S = state.shape
    H1 = pk["wa2"].shape[0]
    H2 = pk["wa2"].shape[1]
    A_pad = pk["wa3"].shape[1]
    A = pk["action_size"]

    # Pick TB so that whenever B > 8 the grid has >= 2 tiles (lets the "parallel"
    # batch axis be sharded across v7x's two TensorCores), capped at tile_b.
    TB = min(tile_b, max(8, _round_up(pl.cdiv(B, 2), 8)))
    n_tiles = pl.cdiv(B, TB)   # ragged last tile handled by Pallas boundary blocks

    x = state.astype(jnp.float32)   # no jnp.pad: avoids a full extra HBM pass over x

    kernel = functools.partial(_dueling_kernel, h1=H1, tb=TB, b_valid=B, a_valid=A)

    def full_spec(arr):
        # whole array resident in VMEM across all batch tiles (constant block index)
        return pl.BlockSpec(arr.shape, lambda i, _n=arr.ndim: (0,) * _n)

    in_specs = [
        pl.BlockSpec((TB, S), lambda i: (i, 0)),
        full_spec(pk["w1"]), full_spec(pk["b1"]),
        full_spec(pk["wa2"]), full_spec(pk["ba2"]),
        full_spec(pk["wa3"]), full_spec(pk["ba3"]),
        full_spec(pk["wv2"]), full_spec(pk["bv2"]),
        full_spec(pk["wv3"]), full_spec(pk["bv3"]),
    ]
    out_specs = [
        pl.BlockSpec((TB, A_pad), lambda i: (i, 0)),
        # per-tile partial advantage sum, written as a full (8,128) vreg tile for clean layout
        pl.BlockSpec((1, 8, 128), lambda i: (i, 0, 0)),
    ]
    out_shape = (
        jax.ShapeDtypeStruct((B, A_pad), jnp.float32),
        jax.ShapeDtypeStruct((n_tiles, 8, 128), jnp.float32),
    )

    # Right-size the VMEM limit from the actual footprint (weights + per-row f32/bf16
    # intermediates + double-buffered x / q tiles), with headroom; floor at 16 MiB.
    weights_bytes = sum(int(v.size) * v.dtype.itemsize
                        for v in pk.values() if isinstance(v, jax.Array))
    per_row_bytes = 12 * (S + 2 * H1 + 2 * H2 + A_pad)   # ~1.8x headroom over exact
    vmem_limit = int(max(16 * 1024 * 1024,
                         min(100 * 1024 * 1024,
                             4 * 1024 * 1024 + 3 * weights_bytes + TB * per_row_bytes)))

    q_raw, asum = pl.pallas_call(
        kernel,
        out_shape=out_shape,
        grid_spec=pltpu.PrefetchScalarGridSpec(
            num_scalar_prefetch=0,
            grid=(n_tiles,),
            in_specs=in_specs,
            out_specs=out_specs,
        ),
        compiler_params=pltpu.CompilerParams(
            dimension_semantics=("parallel",),
            vmem_limit_bytes=vmem_limit,
        ),
    )(x, pk["w1"], pk["b1"], pk["wa2"], pk["ba2"], pk["wa3"], pk["ba3"],
      pk["wv2"], pk["bv2"], pk["wv3"], pk["bv3"])

    # Global mean over ALL (B, A) advantage elements (PyTorch .mean() with no dim);
    # pad rows and pad columns were masked out of the per-tile partial sums.
    adv_mean = jnp.sum(asum[:, 0, 0]) / (B * A)
    # Slice off the lane-padding columns; fuses into the subtraction.
    return q_raw[:, :A] - adv_mean


# ------------------------- init + pure-f32 reference -------------------------

def init_linear(key, fan_in, fan_out):
    """Mimics nn.Linear default init: U(-1/sqrt(in), 1/sqrt(in))."""
    kw, kb = jax.random.split(key)
    bound = 1.0 / math.sqrt(fan_in)
    w = jax.random.uniform(kw, (fan_in, fan_out), jnp.float32, -bound, bound)
    b = jax.random.uniform(kb, (1, fan_out), jnp.float32, -bound, bound)
    return w, b


def init_params(key, state_size, action_size, hidden=(128, 128)):
    keys = jax.random.split(key, 6)
    h1, h2 = hidden
    p = {}
    p["wa1"], p["ba1"] = init_linear(keys[0], state_size, h1)
    p["wa2"], p["ba2"] = init_linear(keys[1], h1, h2)
    p["wa3"], p["ba3"] = init_linear(keys[2], h2, action_size)
    p["wv1"], p["bv1"] = init_linear(keys[3], state_size, h1)
    p["wv2"], p["bv2"] = init_linear(keys[4], h1, h2)
    p["wv3"], p["bv3"] = init_linear(keys[5], h2, 1)
    return p


def reference_forward(state, p):
    def mlp(x, layers):
        for i, (w, b) in enumerate(layers):
            x = x @ w + b
            if i < len(layers) - 1:
                x = jnp.maximum(x, 0.0)
        return x

    adv = mlp(state, [(p["wa1"], p["ba1"]), (p["wa2"], p["ba2"]), (p["wa3"], p["ba3"])])
    val = mlp(state, [(p["wv1"], p["bv1"]), (p["wv2"], p["bv2"]), (p["wv3"], p["bv3"])])
    return adv - jnp.mean(adv) + val


if __name__ == "__main__":
    key = jax.random.PRNGKey(0)
    k_params, k_s1, k_s2 = jax.random.split(key, 3)

    state_size = 32
    action_size = 8
    hidden = (128, 128)   # small stand-in for the default 512x512 hidden sizes

    params = init_params(k_params, state_size, action_size, hidden)
    packed = pack_params(params)

    # Case 1: small batch, single tile (grid=(1,)).
    s1 = jax.random.normal(k_s1, (8, state_size), jnp.float32)
    out1 = jax.block_until_ready(dueling_forward(s1, packed))
    ref1 = reference_forward(s1, params)
    assert out1.shape == (8, action_size)
    assert jnp.allclose(out1, ref1, atol=5e-2, rtol=5e-2), "case 1 mismatch vs reference"

    # Case 2: exercises the batch grid (3 tiles of 8) with a ragged last tile
    # (no padded copy of x; masked rows in the global advantage mean).
    s2 = jax.random.normal(k_s2, (20, state_size), jnp.float32)
    out2 = jax.block_until_ready(dueling_forward(s2, packed, tile_b=8))
    ref2 = reference_forward(s2, params)
    assert out2.shape == (20, action_size)
    assert jnp.allclose(out2, ref2, atol=5e-2, rtol=5e-2), "case 2 mismatch vs reference"

    # Case 3: default tile heuristic -> TB=16, 2 tiles (dual-TC-friendly grid shape),
    # ragged last tile with 12 out-of-bounds rows.
    out3 = jax.block_until_ready(dueling_forward(s2, packed))
    assert out3.shape == (20, action_size)
    assert jnp.allclose(out3, ref2, atol=5e-2, rtol=5e-2), "case 3 mismatch vs reference"

    print("KERNEL_OK")
</pallas_src>

<mosaic_0001>
module attributes {stable_mosaic.version = 11 : i64} {
  func.func @_dueling_kernel(%arg0: i32, %arg1: memref<8x32xf32, #tpu.memory_space<vmem>>, %arg2: memref<32x256xbf16, #tpu.memory_space<vmem>>, %arg3: memref<1x256xf32, #tpu.memory_space<vmem>>, %arg4: memref<128x128xbf16, #tpu.memory_space<vmem>>, %arg5: memref<1x128xf32, #tpu.memory_space<vmem>>, %arg6: memref<128x128xbf16, #tpu.memory_space<vmem>>, %arg7: memref<1x128xf32, #tpu.memory_space<vmem>>, %arg8: memref<128x128xbf16, #tpu.memory_space<vmem>>, %arg9: memref<1x128xf32, #tpu.memory_space<vmem>>, %arg10: memref<1x128xf32, #tpu.memory_space<vmem>>, %arg11: memref<1x1xf32, #tpu.memory_space<vmem>>, %arg12: memref<8x128xf32, #tpu.memory_space<vmem>>, %arg13: memref<1x8x128xf32, #tpu.memory_space<vmem>>) attributes {dimension_semantics = [#tpu.dimension_semantics<parallel>], iteration_bounds = array<i64: 1>, scalar_prefetch = 0 : i64, scratch_operands = 0 : i64, tpu.core_type = #tpu.core_type<tc>, window_params = [{transform_indices = @transform_0, window_bounds = array<i64: 8, 32>}, {pipeline_mode = #tpu.pipeline_mode<synchronous>, transform_indices = @transform_1, window_bounds = array<i64: 32, 256>}, {pipeline_mode = #tpu.pipeline_mode<synchronous>, transform_indices = @transform_2, window_bounds = array<i64: 1, 256>}, {pipeline_mode = #tpu.pipeline_mode<synchronous>, transform_indices = @transform_3, window_bounds = array<i64: 128, 128>}, {pipeline_mode = #tpu.pipeline_mode<synchronous>, transform_indices = @transform_4, window_bounds = array<i64: 1, 128>}, {pipeline_mode = #tpu.pipeline_mode<synchronous>, transform_indices = @transform_5, window_bounds = array<i64: 128, 128>}, {pipeline_mode = #tpu.pipeline_mode<synchronous>, transform_indices = @transform_6, window_bounds = array<i64: 1, 128>}, {pipeline_mode = #tpu.pipeline_mode<synchronous>, transform_indices = @transform_7, window_bounds = array<i64: 128, 128>}, {pipeline_mode = #tpu.pipeline_mode<synchronous>, transform_indices = @transform_8, window_bounds = array<i64: 1, 128>}, {pipeline_mode = #tpu.pipeline_mode<synchronous>, transform_indices = @transform_9, window_bounds = array<i64: 1, 128>}, {pipeline_mode = #tpu.pipeline_mode<synchronous>, transform_indices = @transform_10, window_bounds = array<i64: 1, 1>}, {transform_indices = @transform_11, window_bounds = array<i64: 8, 128>}, {transform_indices = @transform_12, window_bounds = array<i64: 1, 8, 128>}]} {
    %c0 = arith.constant 0 : index
    %c0_0 = arith.constant 0 : index
    %0 = vector.load %arg1[%c0, %c0_0] : memref<8x32xf32, #tpu.memory_space<vmem>>, vector<8x32xf32>
    %1 = arith.truncf %0 : vector<8x32xf32> to vector<8x32xbf16>
    %c0_1 = arith.constant 0 : index
    %c0_2 = arith.constant 0 : index
    %2 = vector.load %arg2[%c0_1, %c0_2] : memref<32x256xbf16, #tpu.memory_space<vmem>>, vector<32x256xbf16>
    %cst = arith.constant dense<0.000000e+00> : vector<8x256xf32>
    %3 = tpu.matmul %1, %2, %cst {dimension_numbers = #tpu.dot_dimension_numbers<[1], [0], [0], [1], [0, 0, 1, 1], [], []>} : vector<8x32xbf16>, vector<32x256xbf16>, vector<8x256xf32> -> vector<8x256xf32>
    %c0_3 = arith.constant 0 : index
    %c0_4 = arith.constant 0 : index
    %4 = vector.load %arg3[%c0_3, %c0_4] : memref<1x256xf32, #tpu.memory_space<vmem>>, vector<1x256xf32>
    %5 = vector.broadcast %4 : vector<1x256xf32> to vector<8x256xf32>
    %6 = arith.addf %3, %5 : vector<8x256xf32>
    %cst_5 = arith.constant 0.000000e+00 : f32
    %7 = vector.broadcast %cst_5 : f32 to vector<8x256xf32>
    %8 = arith.maximumf %6, %7 : vector<8x256xf32>
    %9 = vector.extract_strided_slice %8 {offsets = [0, 0], sizes = [8, 128], strides = [1, 1]} : vector<8x256xf32> to vector<8x128xf32>
    %10 = vector.extract_strided_slice %8 {offsets = [0, 128], sizes = [8, 128], strides = [1, 1]} : vector<8x256xf32> to vector<8x128xf32>
    %11 = arith.truncf %9 : vector<8x128xf32> to vector<8x128xbf16>
    %c0_6 = arith.constant 0 : index
    %c0_7 = arith.constant 0 : index
    %12 = vector.load %arg4[%c0_6, %c0_7] : memref<128x128xbf16, #tpu.memory_space<vmem>>, vector<128x128xbf16>
    %cst_8 = arith.constant dense<0.000000e+00> : vector<8x128xf32>
    %13 = tpu.matmul %11, %12, %cst_8 {dimension_numbers = #tpu.dot_dimension_numbers<[1], [0], [0], [1], [0, 0, 1, 1], [], []>} : vector<8x128xbf16>, vector<128x128xbf16>, vector<8x128xf32> -> vector<8x128xf32>
    %14 = arith.truncf %10 : vector<8x128xf32> to vector<8x128xbf16>
    %c0_9 = arith.constant 0 : index
    %c0_10 = arith.constant 0 : index
    %15 = vector.load %arg8[%c0_9, %c0_10] : memref<128x128xbf16, #tpu.memory_space<vmem>>, vector<128x128xbf16>
    %cst_11 = arith.constant dense<0.000000e+00> : vector<8x128xf32>
    %16 = tpu.matmul %14, %15, %cst_11 {dimension_numbers = #tpu.dot_dimension_numbers<[1], [0], [0], [1], [0, 0, 1, 1], [], []>} : vector<8x128xbf16>, vector<128x128xbf16>, vector<8x128xf32> -> vector<8x128xf32>
    %c0_12 = arith.constant 0 : index
    %c0_13 = arith.constant 0 : index
    %17 = vector.load %arg5[%c0_12, %c0_13] : memref<1x128xf32, #tpu.memory_space<vmem>>, vector<1x128xf32>
    %18 = vector.broadcast %17 : vector<1x128xf32> to vector<8x128xf32>
    %19 = arith.addf %13, %18 : vector<8x128xf32>
    %cst_14 = arith.constant 0.000000e+00 : f32
    %20 = vector.broadcast %cst_14 : f32 to vector<8x128xf32>
    %21 = arith.maximumf %19, %20 : vector<8x128xf32>
    %c0_15 = arith.constant 0 : index
    %c0_16 = arith.constant 0 : index
    %22 = vector.load %arg9[%c0_15, %c0_16] : memref<1x128xf32, #tpu.memory_space<vmem>>, vector<1x128xf32>
    %23 = vector.broadcast %22 : vector<1x128xf32> to vector<8x128xf32>
    %24 = arith.addf %16, %23 : vector<8x128xf32>
    %cst_17 = arith.constant 0.000000e+00 : f32
    %25 = vector.broadcast %cst_17 : f32 to vector<8x128xf32>
    %26 = arith.maximumf %24, %25 : vector<8x128xf32>
    %27 = arith.truncf %21 : vector<8x128xf32> to vector<8x128xbf16>
    %c0_18 = arith.constant 0 : index
    %c0_19 = arith.constant 0 : index
    %28 = vector.load %arg6[%c0_18, %c0_19] : memref<128x128xbf16, #tpu.memory_space<vmem>>, vector<128x128xbf16>
    %cst_20 = arith.constant dense<0.000000e+00> : vector<8x128xf32>
    %29 = tpu.matmul %27, %28, %cst_20 {dimension_numbers = #tpu.dot_dimension_numbers<[1], [0], [0], [1], [0, 0, 1, 1], [], []>} : vector<8x128xbf16>, vector<128x128xbf16>, vector<8x128xf32> -> vector<8x128xf32>
    %c0_21 = arith.constant 0 : index
    %c0_22 = arith.constant 0 : index
    %30 = vector.load %arg7[%c0_21, %c0_22] : memref<1x128xf32, #tpu.memory_space<vmem>>, vector<1x128xf32>
    %31 = vector.broadcast %30 : vector<1x128xf32> to vector<8x128xf32>
    %32 = arith.addf %29, %31 : vector<8x128xf32>
    %c0_23 = arith.constant 0 : index
    %c0_24 = arith.constant 0 : index
    %33 = vector.load %arg10[%c0_23, %c0_24] : memref<1x128xf32, #tpu.memory_space<vmem>>, vector<1x128xf32>
    %34 = vector.broadcast %33 : vector<1x128xf32> to vector<8x128xf32>
    %35 = arith.mulf %26, %34 : vector<8x128xf32>
    %cst_25 = arith.constant dense<0.000000e+00> : vector<8xf32>
    %36 = vector.multi_reduction <add>, %35, %cst_25 [1] : vector<8x128xf32> to vector<8xf32>
    %37 = vector.shape_cast %36 : vector<8xf32> to vector<8x1xf32>
    %c0_26 = arith.constant 0 : index
    %c0_27 = arith.constant 0 : index
    %38 = vector.load %arg11[%c0_26, %c0_27] : memref<1x1xf32, #tpu.memory_space<vmem>>, vector<1x1xf32>
    %39 = vector.broadcast %38 : vector<1x1xf32> to vector<8x1xf32>
    %40 = arith.addf %37, %39 : vector<8x1xf32>
    %41 = vector.broadcast %40 : vector<8x1xf32> to vector<8x128xf32>
    %42 = arith.addf %32, %41 : vector<8x128xf32>
    %c0_28 = arith.constant 0 : index
    %c0_29 = arith.constant 0 : index
    %43 = vector.load %arg12[%c0_28, %c0_29] : memref<8x128xf32, #tpu.memory_space<vmem>>, vector<8x128xf32>
    tpu.vector_store %arg12[%c0_28, %c0_29], %42 {strides = array<i32>} : memref<8x128xf32, #tpu.memory_space<vmem>>, vector<8x128xf32>,
    %c8_i32 = arith.constant 8 : i32
    %44 = arith.muli %arg0, %c8_i32 : i32
    %45 = tpu.iota {dimensions = array<i32: 0>} : vector<8x128xi32>
    %46 = vector.broadcast %44 : i32 to vector<8x128xi32>
    %47 = arith.addi %46, %45 : vector<8x128xi32>
    %48 = tpu.iota {dimensions = array<i32: 1>} : vector<8x128xi32>
    %c8_i32_30 = arith.constant 8 : i32
    %49 = vector.broadcast %c8_i32_30 : i32 to vector<8x128xi32>
    %50 = arith.cmpi slt, %47, %49 : vector<8x128xi32>
    %c8_i32_31 = arith.constant 8 : i32
    %51 = vector.broadcast %c8_i32_31 : i32 to vector<8x128xi32>
    %52 = arith.cmpi slt, %48, %51 : vector<8x128xi32>
    %53 = arith.andi %50, %52 : vector<8x128xi1>
    %cst_32 = arith.constant 0.000000e+00 : f32
    %54 = vector.broadcast %cst_32 : f32 to vector<8x128xf32>
    %55 = arith.select %53, %32, %54 : vector<8x128xi1>, vector<8x128xf32>
    %56 = vector.shape_cast %55 : vector<8x128xf32> to vector<1x8x128xf32>
    %cst_33 = arith.constant dense<0.000000e+00> : vector<1xf32>
    %57 = vector.multi_reduction <add>, %56, %cst_33 [1, 2] : vector<1x8x128xf32> to vector<1xf32>
    %58 = vector.shape_cast %57 : vector<1xf32> to vector<1x1x1xf32>
    %59 = vector.extract %58[0, 0, 0] : f32 from vector<1x1x1xf32>
    %60 = vector.broadcast %59 : f32 to vector<1x8x128xf32>
    %c0_34 = arith.constant 0 : index
    %c0_35 = arith.constant 0 : index
    %c0_36 = arith.constant 0 : index
    %61 = vector.load %arg13[%c0_34, %c0_35, %c0_36] : memref<1x8x128xf32, #tpu.memory_space<vmem>>, vector<1x8x128xf32>
    tpu.vector_store %arg13[%c0_34, %c0_35, %c0_36], %60 {strides = array<i32>} : memref<1x8x128xf32, #tpu.memory_space<vmem>>, vector<1x8x128xf32>,
    return
  }
  func.func @transform_0(%arg0: i32) -> (i32, i32) {
    %c0_i32 = arith.constant 0 : i32
    %c0_i32_0 = arith.constant 0 : i32
    return %arg0, %c0_i32 : i32, i32
  }
  func.func @transform_1(%arg0: i32) -> (i32, i32) {
    %c0_i32 = arith.constant 0 : i32
    %c0_i32_0 = arith.constant 0 : i32
    %c0_i32_1 = arith.constant 0 : i32
    return %c0_i32, %c0_i32_0 : i32, i32
  }
  func.func @transform_2(%arg0: i32) -> (i32, i32) {
    %c0_i32 = arith.constant 0 : i32
    %c0_i32_0 = arith.constant 0 : i32
    %c0_i32_1 = arith.constant 0 : i32
    return %c0_i32, %c0_i32_0 : i32, i32
  }
  func.func @transform_3(%arg0: i32) -> (i32, i32) {
    %c0_i32 = arith.constant 0 : i32
    %c0_i32_0 = arith.constant 0 : i32
    %c0_i32_1 = arith.constant 0 : i32
    return %c0_i32, %c0_i32_0 : i32, i32
  }
  func.func @transform_4(%arg0: i32) -> (i32, i32) {
    %c0_i32 = arith.constant 0 : i32
    %c0_i32_0 = arith.constant 0 : i32
    %c0_i32_1 = arith.constant 0 : i32
    return %c0_i32, %c0_i32_0 : i32, i32
  }
  func.func @transform_5(%arg0: i32) -> (i32, i32) {
    %c0_i32 = arith.constant 0 : i32
    %c0_i32_0 = arith.constant 0 : i32
    %c0_i32_1 = arith.constant 0 : i32
    return %c0_i32, %c0_i32_0 : i32, i32
  }
  func.func @transform_6(%arg0: i32) -> (i32, i32) {
    %c0_i32 = arith.constant 0 : i32
    %c0_i32_0 = arith.constant 0 : i32
    %c0_i32_1 = arith.constant 0 : i32
    return %c0_i32, %c0_i32_0 : i32, i32
  }
  func.func @transform_7(%arg0: i32) -> (i32, i32) {
    %c0_i32 = arith.constant 0 : i32
    %c0_i32_0 = arith.constant 0 : i32
    %c0_i32_1 = arith.constant 0 : i32
    return %c0_i32, %c0_i32_0 : i32, i32
  }
  func.func @transform_8(%arg0: i32) -> (i32, i32) {
    %c0_i32 = arith.constant 0 : i32
    %c0_i32_0 = arith.constant 0 : i32
    %c0_i32_1 = arith.constant 0 : i32
    return %c0_i32, %c0_i32_0 : i32, i32
  }
  func.func @transform_9(%arg0: i32) -> (i32, i32) {
    %c0_i32 = arith.constant 0 : i32
    %c0_i32_0 = arith.constant 0 : i32
    %c0_i32_1 = arith.constant 0 : i32
    return %c0_i32, %c0_i32_0 : i32, i32
  }
  func.func @transform_10(%arg0: i32) -> (i32, i32) {
    %c0_i32 = arith.constant 0 : i32
    %c0_i32_0 = arith.constant 0 : i32
    %c0_i32_1 = arith.constant 0 : i32
    return %c0_i32, %c0_i32_0 : i32, i32
  }
  func.func @transform_11(%arg0: i32) -> (i32, i32) {
    %c0_i32 = arith.constant 0 : i32
    %c0_i32_0 = arith.constant 0 : i32
    return %arg0, %c0_i32 : i32, i32
  }
  func.func @transform_12(%arg0: i32) -> (i32, i32, i32) {
    %c0_i32 = arith.constant 0 : i32
    %c0_i32_0 = arith.constant 0 : i32
    %c0_i32_1 = arith.constant 0 : i32
    return %arg0, %c0_i32, %c0_i32_0 : i32, i32, i32
  }
}

</mosaic_0001>

<llo_original>
// kernel: tpu_custom_call.1
$region0: #{tpu_custom_call.1}
  #allocation0 [shape = 'u32[]', space=smem, size = 0x4, offset = 0x4, fixed_abs, tag = 'smem constant byte address 0x4 - core index']
  #allocation1 [shape = 'u32[72,128]{1,0:T(1,128)}', space=vmem, size = 0x9000, scoped, tag = 'internal scratch']
  #allocation2 [shape = 'f32[1,1]{1,0:T(1,128)S(1)}', space=vmem, size = 0x200, scoped, tag = 'scoped memory for tpu_custom_call.1']
  %s0 = inlined_call_operand.hbm [shape: f32[8,32], index: 0, kind: input, shape index: {}]
  %s1 = inlined_call_operand.hbm [shape: bf16[32,256], index: 1, kind: input, shape index: {}]
  %s2 = inlined_call_operand.vmem [shape: f32[1,256], index: 2, kind: input, shape index: {}]
  %s3 = inlined_call_operand.hbm [shape: bf16[128,128], index: 3, kind: input, shape index: {}]
  %s4 = inlined_call_operand.vmem [shape: f32[1,128], index: 4, kind: input, shape index: {}]
  %s5 = inlined_call_operand.hbm [shape: bf16[128,128], index: 5, kind: input, shape index: {}]
  %s6 = inlined_call_operand.vmem [shape: f32[1,128], index: 6, kind: input, shape index: {}]
  %s7 = inlined_call_operand.hbm [shape: bf16[128,128], index: 7, kind: input, shape index: {}]
  %s8 = inlined_call_operand.vmem [shape: f32[1,128], index: 8, kind: input, shape index: {}]
  %s9 = inlined_call_operand.vmem [shape: f32[1,128], index: 9, kind: input, shape index: {}]
  %s10 = inlined_call_operand.<no memory space> [shape: f32[1,1], index: 10, kind: input, shape index: {}]
  %s11 = inlined_call_operand.hbm [shape: f32[8,128], index: 11, kind: output, shape index: {0}]
  %s12 = inlined_call_operand.hbm [shape: f32[1,8,128], index: 12, kind: output, shape index: {1}]
  %13 = xla_tuple %s11, %s12
  %s14 = sld [smem:[#allocation0]]
  $region82: #{tpu_custom_call.1} parent=0
    _
  %s16 = ssub.s32 1, %s14
  %s17 = scalar_select 0, %s16, %s14
  %v18 = vstv %s10
  %19 = vst [vmem:[#allocation2] sm:$0x1] %v18
  $region1: #{tpu_custom_call.1} parent=0
    #allocation3 [shape = 'u8[4096]{0}', space=vmem, size = 0x1000, scoped, tag = 'input window, operand 0, single buffered']
    #allocation4 [shape = 's32[1]{0}', space=sflag, size = 0x4, scoped, tag = 'scoped memory for tpu_custom_call.1']
    #allocation5 [shape = 's32[1]{0}', space=sflag, size = 0x4, scoped, tag = 'scoped memory for tpu_custom_call.1']
    #allocation6 [shape = 'u8[16384]{0}', space=vmem, size = 0x4000, scoped, tag = 'input window, operand 1, single buffered']
    #allocation7 [shape = 's32[1]{0}', space=sflag, size = 0x4, scoped, tag = 'scoped memory for tpu_custom_call.1']
    #allocation8 [shape = 'u8[32768]{0}', space=vmem, size = 0x8000, scoped, tag = 'input window, operand 3, single buffered']
    #allocation9 [shape = 'u8[32768]{0}', space=vmem, size = 0x8000, scoped, tag = 'input window, operand 5, single buffered']
    #allocation10 [shape = 's32[1]{0}', space=sflag, size = 0x4, scoped, tag = 'scoped memory for tpu_custom_call.1']
    #allocation11 [shape = 'u8[32768]{0}', space=vmem, size = 0x8000, scoped, tag = 'input window, operand 7, single buffered']
    #allocation12 [shape = 'u8[4096]{0}', space=vmem, size = 0x1000, scoped, tag = 'output window, operand 0, single buffered']
    #allocation13 [shape = 'u8[4096]{0}', space=vmem, size = 0x1000, scoped, tag = 'output window, operand 1, single buffered']
    #allocation14 [shape = 's32[1]{0}', space=sflag, size = 0x4, scoped, tag = 'scoped memory for tpu_custom_call.1']
    %20 = vsyncpa [#allocation4], 0
    %21 = vsyncpa [#allocation7], 0
    %22 = vsyncpa [#allocation10], 0
    %23 = vsyncpa [#allocation5], 0
    %24 = vsyncpa [#allocation14], 0
    // Predicated region
    $region2: #{tpu_custom_call.1} parent=1 // pred_check
      _
    $region3: #{tpu_custom_call.1} parent=1 // pred_check_branch
      %26 = sbr.rel (0) target = $region5
    $region4: #{tpu_custom_call.1} parent=1 // pred_region
      %28 = vsyncadd [#allocation4], 0
      %s30 = sshll.u32 %s0, 4
      %s31 = int_to_ptr.hbm [resolvable:$true] %s30
      %s32 = sshll.u32 [#allocation3], 4
      %s33 = int_to_ptr.vmem [resolvable:$true] %s32
      %35 = dma.hbm_to_vmem [thread:$0]  %s31, 128, %s33, [#allocation4]
    $region5: #{tpu_custom_call.1} parent=1 // pred_fallthru
      _
    // Predicated region
    $region6: #{tpu_custom_call.1} parent=1 // pred_check
      _
    $region7: #{tpu_custom_call.1} parent=1 // pred_check_branch
      %37 = sbr.rel (0) target = $region9
    $region8: #{tpu_custom_call.1} parent=1 // pred_region
      %39 = vsyncadd [#allocation7], 0
      %s40 = sshll.u32 %s1, 4
      %s41 = int_to_ptr.hbm [resolvable:$true] %s40
      %s42 = sshll.u32 [#allocation6], 4
      %s43 = int_to_ptr.vmem [resolvable:$true] %s42
      %48 = dma.hbm_to_vmem [thread:$0]  %s41, 512, %s43, [#allocation7], 128, 128, 8
    $region9: #{tpu_custom_call.1} parent=1 // pred_fallthru
      _
    // Predicated region
    $region10: #{tpu_custom_call.1} parent=1 // pred_check
      _
    $region11: #{tpu_custom_call.1} parent=1 // pred_check_branch
      %50 = sbr.rel (0) target = $region13
    $region12: #{tpu_custom_call.1} parent=1 // pred_region
      _
    $region13: #{tpu_custom_call.1} parent=1 // pred_fallthru
      _
    // Predicated region
    $region14: #{tpu_custom_call.1} parent=1 // pred_check
      _
    $region15: #{tpu_custom_call.1} parent=1 // pred_check_branch
      %52 = sbr.rel (0) target = $region17
    $region16: #{tpu_custom_call.1} parent=1 // pred_region
      %54 = vsyncadd [#allocation7], 0
      %s55 = sshll.u32 %s3, 4
      %s56 = int_to_ptr.hbm [resolvable:$true] %s55
      %s57 = sshll.u32 [#allocation8], 4
      %s58 = int_to_ptr.vmem [resolvable:$true] %s57
      %63 = dma.hbm_to_vmem [thread:$0]  %s56, 1024, %s58, [#allocation7], 64, 64, 4
    $region17: #{tpu_custom_call.1} parent=1 // pred_fallthru
      _
    // Predicated region
    $region18: #{tpu_custom_call.1} parent=1 // pred_check
      _
    $region19: #{tpu_custom_call.1} parent=1 // pred_check_branch
      %65 = sbr.rel (0) target = $region21
    $region20: #{tpu_custom_call.1} parent=1 // pred_region
      _
    $region21: #{tpu_custom_call.1} parent=1 // pred_fallthru
      _
    // Predicated region
    $region22: #{tpu_custom_call.1} parent=1 // pred_check
      _
    $region23: #{tpu_custom_call.1} parent=1 // pred_check_branch
      %67 = sbr.rel (0) target = $region25
    $region24: #{tpu_custom_call.1} parent=1 // pred_region
      %69 = vsyncadd [#allocation10], 0
      %s70 = sshll.u32 %s5, 4
      %s71 = int_to_ptr.hbm [resolvable:$true] %s70
      %s72 = sshll.u32 [#allocation9], 4
      %s73 = int_to_ptr.vmem [resolvable:$true] %s72
      %78 = dma.hbm_to_vmem [thread:$0]  %s71, 1024, %s73, [#allocation10], 64, 64, 4
    $region25: #{tpu_custom_call.1} parent=1 // pred_fallthru
      _
    // Predicated region
    $region26: #{tpu_custom_call.1} parent=1 // pred_check
      _
    $region27: #{tpu_custom_call.1} parent=1 // pred_check_branch
      %80 = sbr.rel (0) target = $region29
    $region28: #{tpu_custom_call.1} parent=1 // pred_region
      _
    $region29: #{tpu_custom_call.1} parent=1 // pred_fallthru
      _
    // Predicated region
    $region30: #{tpu_custom_call.1} parent=1 // pred_check
      _
    $region31: #{tpu_custom_call.1} parent=1 // pred_check_branch
      %82 = sbr.rel (0) target = $region33
    $region32: #{tpu_custom_call.1} parent=1 // pred_region
      %84 = vsyncadd [#allocation10], 0
      %s85 = sshll.u32 %s7, 4
      %s86 = int_to_ptr.hbm [resolvable:$true] %s85
      %s87 = sshll.u32 [#allocation11], 4
      %s88 = int_to_ptr.vmem [resolvable:$true] %s87
      %93 = dma.hbm_to_vmem [thread:$0]  %s86, 1024, %s88, [#allocation10], 64, 64, 4
    $region33: #{tpu_custom_call.1} parent=1 // pred_fallthru
      _
    // Predicated region
    $region34: #{tpu_custom_call.1} parent=1 // pred_check
      _
    $region35: #{tpu_custom_call.1} parent=1 // pred_check_branch
      %95 = sbr.rel (0) target = $region37
    $region36: #{tpu_custom_call.1} parent=1 // pred_region
      _
    $region37: #{tpu_custom_call.1} parent=1 // pred_fallthru
      _
    // Predicated region
    $region38: #{tpu_custom_call.1} parent=1 // pred_check
      _
    $region39: #{tpu_custom_call.1} parent=1 // pred_check_branch
      %97 = sbr.rel (0) target = $region41
    $region40: #{tpu_custom_call.1} parent=1 // pred_region
      _
    $region41: #{tpu_custom_call.1} parent=1 // pred_fallthru
      _
    // Predicated region
    $region42: #{tpu_custom_call.1} parent=1 // pred_check
      _
    $region43: #{tpu_custom_call.1} parent=1 // pred_check_branch
      %99 = sbr.rel (0) target = $region45
    $region44: #{tpu_custom_call.1} parent=1 // pred_region
      _
    $region45: #{tpu_custom_call.1} parent=1 // pred_fallthru
      _
    // Predicated region
    $region46: #{tpu_custom_call.1} parent=1 // pred_check
      _
    $region47: #{tpu_custom_call.1} parent=1 // pred_check_branch
      %101 = sbr.rel (0) target = $region49
    $region48: #{tpu_custom_call.1} parent=1 // pred_region
      %103 = dma.done [#allocation4], 128
    $region49: #{tpu_custom_call.1} parent=1 // pred_fallthru
      _
    // Predicated region
    $region50: #{tpu_custom_call.1} parent=1 // pred_check
      _
    $region51: #{tpu_custom_call.1} parent=1 // pred_check_branch
      %105 = sbr.rel (0) target = $region53
    $region52: #{tpu_custom_call.1} parent=1 // pred_region
      %107 = dma.done [#allocation7], 512
    $region53: #{tpu_custom_call.1} parent=1 // pred_fallthru
      _
    // Predicated region
    $region54: #{tpu_custom_call.1} parent=1 // pred_check
      _
    $region55: #{tpu_custom_call.1} parent=1 // pred_check_branch
      %109 = sbr.rel (0) target = $region57
    $region56: #{tpu_custom_call.1} parent=1 // pred_region
      %111 = dma.done [#allocation7], 1024
    $region57: #{tpu_custom_call.1} parent=1 // pred_fallthru
      _
    // Predicated region
    $region58: #{tpu_custom_call.1} parent=1 // pred_check
      _
    $region59: #{tpu_custom_call.1} parent=1 // pred_check_branch
      %113 = sbr.rel (0) target = $region61
    $region60: #{tpu_custom_call.1} parent=1 // pred_region
      %115 = dma.done [#allocation10], 1024
    $region61: #{tpu_custom_call.1} parent=1 // pred_fallthru
      _
    // Predicated region
    $region62: #{tpu_custom_call.1} parent=1 // pred_check
      _
    $region63: #{tpu_custom_call.1} parent=1 // pred_check_branch
      %117 = sbr.rel (0) target = $region65
    $region64: #{tpu_custom_call.1} parent=1 // pred_region
      %119 = dma.done [#allocation10], 1024
    $region65: #{tpu_custom_call.1} parent=1 // pred_fallthru
      _
    %v121 = vld [vmem:[#allocation3] sm:$0xff]
    %v122 = vpack.c.bf16 %v121, %v121
    %v123 = vld [vmem:[#allocation6] sm:$0xff]
    %v124 = vld [vmem:[#allocation6 + $0x8] sm:$0xff]
    %v125 = vld [vmem:[#allocation6 + $0x10] sm:$0xff]
    %v126 = vld [vmem:[#allocation6 + $0x18] sm:$0xff]
    %v127 = vld [vmem:[%s2] sm:$0x3]
    %v129 = vperm.slane %v127, 0
    %v130 = vperm.slane %v127, 1
    %v137 = vunpack.c.l.b16 %v123
    %v138 = vunpack.c.h.b16 %v123
    %v139 = vunpack.c.l.b16 %v124
    %v140 = vunpack.c.h.b16 %v124
    %v141 = vunpack.c.l.b16 %v125
    %v142 = vunpack.c.h.b16 %v125
    %v143 = vunpack.c.l.b16 %v126
    %v144 = vunpack.c.h.b16 %v126
    %v145 = vpack.c.b16 %v139, %v137
    %v146 = vpack.c.b16 %v140, %v138
    %v147 = vpack.c.b16 %v143, %v141
    %v148 = vpack.c.b16 %v144, %v142
    %vm153 = vcmask 261120
    %v155 = vsel %vm153, %v122, 0
    %157 = vmatpush.bf16.msra.mxu0 0
    %158 = vmatpush.bf16.msra.mxu0 0
    %159 = vmatpush.bf16.msra.mxu0 0
    %160 = vmatpush.bf16.msra.mxu0 0
    %161 = vmatpush.bf16.msra.mxu0 0
    %162 = vmatpush.bf16.msra.mxu0 0
    %163 = vmatpush.bf16.msra.mxu0 %v147
    %164 = vmatpush.bf16.msra.mxu0 %v145
    %165 = vmatmul.bf16.gmra.mxu0 %v155
    %v166 = vpop.f32.mrf.mxu0
    %v167 = vadd.f32 %v129, %v166
    %v168 = vpop.f32.mrf.mxu0
    %169 = vdwg.mxu0
    %170 = vmatpush.bf16.msra.mxu0 0
    %171 = vmatpush.bf16.msra.mxu0 0
    %172 = vmatpush.bf16.msra.mxu0 0
    %173 = vmatpush.bf16.msra.mxu0 0
    %174 = vmatpush.bf16.msra.mxu0 0
    %175 = vmatpush.bf16.msra.mxu0 0
    %176 = vmatpush.bf16.msra.mxu0 %v148
    %177 = vmatpush.bf16.msra.mxu0 %v146
    %178 = vmatmul.bf16.gmra.mxu0 %v155
    %v179 = vpop.f32.mrf.mxu0
    %v180 = vadd.f32 %v130, %v179
    %v181 = vpop.f32.mrf.mxu0
    %182 = vdwg.mxu0
    %v183 = vmax.f32 %v167, 0.0
    %v184 = vmax.f32 %v180, 0.0
    %v185 = vpack.c.bf16 %v183, %v183
    %v186 = vld [vmem:[#allocation8] sm:$0xf]
    %v187 = vld [vmem:[#allocation8 + $0x4] sm:$0xf]
    %v188 = vld [vmem:[#allocation8 + $0x8] sm:$0xf]
    %v189 = vld [vmem:[#allocation8 + $0xc] sm:$0xf]
    %v190 = vld [vmem:[#allocation8 + $0x10] sm:$0xf]
    %v191 = vld [vmem:[#allocation8 + $0x14] sm:$0xf]
    %v192 = vld [vmem:[#allocation8 + $0x18] sm:$0xf]
    %v193 = vld [vmem:[#allocation8 + $0x1c] sm:$0xf]
    %v194 = vld [vmem:[#allocation8 + $0x20] sm:$0xf]
    %v195 = vld [vmem:[#allocation8 + $0x24] sm:$0xf]
    %v196 = vld [vmem:[#allocation8 + $0x28] sm:$0xf]
    %v197 = vld [vmem:[#allocation8 + $0x2c] sm:$0xf]
    %v198 = vld [vmem:[#allocation8 + $0x30] sm:$0xf]
    %v199 = vld [vmem:[#allocation8 + $0x34] sm:$0xf]
    %v200 = vld [vmem:[#allocation8 + $0x38] sm:$0xf]
    %v201 = vld [vmem:[#allocation8 + $0x3c] sm:$0xf]
    %v202 = vpack.c.bf16 %v184, %v184
    %v203 = vld [vmem:[#allocation11] sm:$0xf]
    %v204 = vld [vmem:[#allocation11 + $0x4] sm:$0xf]
    %v205 = vld [vmem:[#allocation11 + $0x8] sm:$0xf]
    %v206 = vld [vmem:[#allocation11 + $0xc] sm:$0xf]
    %v207 = vld [vmem:[#allocation11 + $0x10] sm:$0xf]
    %v208 = vld [vmem:[#allocation11 + $0x14] sm:$0xf]
    %v209 = vld [vmem:[#allocation11 + $0x18] sm:$0xf]
    %v210 = vld [vmem:[#allocation11 + $0x1c] sm:$0xf]
    %v211 = vld [vmem:[#allocation11 + $0x20] sm:$0xf]
    %v212 = vld [vmem:[#allocation11 + $0x24] sm:$0xf]
    %v213 = vld [vmem:[#allocation11 + $0x28] sm:$0xf]
    %v214 = vld [vmem:[#allocation11 + $0x2c] sm:$0xf]
    %v215 = vld [vmem:[#allocation11 + $0x30] sm:$0xf]
    %v216 = vld [vmem:[#allocation11 + $0x34] sm:$0xf]
    %v217 = vld [vmem:[#allocation11 + $0x38] sm:$0xf]
    %v218 = vld [vmem:[#allocation11 + $0x3c] sm:$0xf]
    %v219 = vld [vmem:[%s4] sm:$0x1]
    %v221 = vperm.slane %v219, 0
    %v239 = vunpack.c.l.b16 %v186
    %v240 = vunpack.c.l.b16 %v187
    %v241 = vunpack.c.l.b16 %v188
    %v242 = vunpack.c.l.b16 %v189
    %v243 = vunpack.c.l.b16 %v190
    %v244 = vunpack.c.l.b16 %v191
    %v245 = vunpack.c.l.b16 %v192
    %v246 = vunpack.c.l.b16 %v193
    %v247 = vunpack.c.l.b16 %v194
    %v248 = vunpack.c.l.b16 %v195
    %v249 = vunpack.c.l.b16 %v196
    %v250 = vunpack.c.l.b16 %v197
    %v251 = vunpack.c.l.b16 %v198
    %v252 = vunpack.c.l.b16 %v199
    %v253 = vunpack.c.l.b16 %v200
    %v254 = vunpack.c.l.b16 %v201
    %v255 = vpack.c.b16 %v240, %v239
    %v256 = vpack.c.b16 %v242, %v241
    %v257 = vpack.c.b16 %v244, %v243
    %v258 = vpack.c.b16 %v246, %v245
    %v259 = vpack.c.b16 %v248, %v247
    %v260 = vpack.c.b16 %v250, %v249
    %v261 = vpack.c.b16 %v252, %v251
    %v262 = vpack.c.b16 %v254, %v253
    %271 = vmatpush.bf16.msra.mxu0 %v262
    %272 = vmatpush.bf16.msra.mxu0 %v261
    %273 = vmatpush.bf16.msra.mxu0 %v260
    %274 = vmatpush.bf16.msra.mxu0 %v259
    %275 = vmatpush.bf16.msra.mxu0 %v258
    %276 = vmatpush.bf16.msra.mxu0 %v257
    %277 = vmatpush.bf16.msra.mxu0 %v256
    %278 = vmatpush.bf16.msra.mxu0 %v255
    %279 = vmatmul.bf16.gmra.mxu0 %v185
    %v280 = vpop.f32.mrf.mxu0
    %v281 = vadd.f32 %v221, %v280
    %v282 = vpop.f32.mrf.mxu0
    %283 = vdwg.mxu0
    %v284 = vmax.f32 %v281, 0.0
    %v285 = vld [vmem:[%s8] sm:$0x1]
    %v287 = vperm.slane %v285, 0
    %v305 = vunpack.c.l.b16 %v203
    %v306 = vunpack.c.l.b16 %v204
    %v307 = vunpack.c.l.b16 %v205
    %v308 = vunpack.c.l.b16 %v206
    %v309 = vunpack.c.l.b16 %v207
    %v310 = vunpack.c.l.b16 %v208
    %v311 = vunpack.c.l.b16 %v209
    %v312 = vunpack.c.l.b16 %v210
    %v313 = vunpack.c.l.b16 %v211
    %v314 = vunpack.c.l.b16 %v212
    %v315 = vunpack.c.l.b16 %v213
    %v316 = vunpack.c.l.b16 %v214
    %v317 = vunpack.c.l.b16 %v215
    %v318 = vunpack.c.l.b16 %v216
    %v319 = vunpack.c.l.b16 %v217
    %v320 = vunpack.c.l.b16 %v218
    %v321 = vpack.c.b16 %v306, %v305
    %v322 = vpack.c.b16 %v308, %v307
    %v323 = vpack.c.b16 %v310, %v309
    %v324 = vpack.c.b16 %v312, %v311
    %v325 = vpack.c.b16 %v314, %v313
    %v326 = vpack.c.b16 %v316, %v315
    %v327 = vpack.c.b16 %v318, %v317
    %v328 = vpack.c.b16 %v320, %v319
    %337 = vmatpush.bf16.msra.mxu0 %v328
    %338 = vmatpush.bf16.msra.mxu0 %v327
    %339 = vmatpush.bf16.msra.mxu0 %v326
    %340 = vmatpush.bf16.msra.mxu0 %v325
    %341 = vmatpush.bf16.msra.mxu0 %v324
    %342 = vmatpush.bf16.msra.mxu0 %v323
    %343 = vmatpush.bf16.msra.mxu0 %v322
    %344 = vmatpush.bf16.msra.mxu0 %v321
    %345 = vmatmul.bf16.gmra.mxu0 %v202
    %v346 = vpop.f32.mrf.mxu0
    %v347 = vadd.f32 %v287, %v346
    %v348 = vpop.f32.mrf.mxu0
    %349 = vdwg.mxu0
    %v350 = vmax.f32 %v347, 0.0
    %v351 = vpack.c.bf16 %v284, %v284
    %v352 = vld [vmem:[#allocation9] sm:$0xf]
    %v353 = vld [vmem:[#allocation9 + $0x4] sm:$0xf]
    %v354 = vld [vmem:[#allocation9 + $0x8] sm:$0xf]
    %v355 = vld [vmem:[#allocation9 + $0xc] sm:$0xf]
    %v356 = vld [vmem:[#allocation9 + $0x10] sm:$0xf]
    %v357 = vld [vmem:[#allocation9 + $0x14] sm:$0xf]
    %v358 = vld [vmem:[#allocation9 + $0x18] sm:$0xf]
    %v359 = vld [vmem:[#allocation9 + $0x1c] sm:$0xf]
    %v360 = vld [vmem:[#allocation9 + $0x20] sm:$0xf]
    %v361 = vld [vmem:[#allocation9 + $0x24] sm:$0xf]
    %v362 = vld [vmem:[#allocation9 + $0x28] sm:$0xf]
    %v363 = vld [vmem:[#allocation9 + $0x2c] sm:$0xf]
    %v364 = vld [vmem:[#allocation9 + $0x30] sm:$0xf]
    %v365 = vld [vmem:[#allocation9 + $0x34] sm:$0xf]
    %v366 = vld [vmem:[#allocation9 + $0x38] sm:$0xf]
    %v367 = vld [vmem:[#allocation9 + $0x3c] sm:$0xf]
    %v368 = vld [vmem:[%s6] sm:$0x1]
    %v370 = vperm.slane %v368, 0
    %v388 = vunpack.c.l.b16 %v352
    %v389 = vunpack.c.l.b16 %v353
    %v390 = vunpack.c.l.b16 %v354
    %v391 = vunpack.c.l.b16 %v355
    %v392 = vunpack.c.l.b16 %v356
    %v393 = vunpack.c.l.b16 %v357
    %v394 = vunpack.c.l.b16 %v358
    %v395 = vunpack.c.l.b16 %v359
    %v396 = vunpack.c.l.b16 %v360
    %v397 = vunpack.c.l.b16 %v361
    %v398 = vunpack.c.l.b16 %v362
    %v399 = vunpack.c.l.b16 %v363
    %v400 = vunpack.c.l.b16 %v364
    %v401 = vunpack.c.l.b16 %v365
    %v402 = vunpack.c.l.b16 %v366
    %v403 = vunpack.c.l.b16 %v367
    %v404 = vpack.c.b16 %v389, %v388
    %v405 = vpack.c.b16 %v391, %v390
    %v406 = vpack.c.b16 %v393, %v392
    %v407 = vpack.c.b16 %v395, %v394
    %v408 = vpack.c.b16 %v397, %v396
    %v409 = vpack.c.b16 %v399, %v398
    %v410 = vpack.c.b16 %v401, %v400
    %v411 = vpack.c.b16 %v403, %v402
    %420 = vmatpush.bf16.msra.mxu0 %v411
    %421 = vmatpush.bf16.msra.mxu0 %v410
    %422 = vmatpush.bf16.msra.mxu0 %v409
    %423 = vmatpush.bf16.msra.mxu0 %v408
    %424 = vmatpush.bf16.msra.mxu0 %v407
    %425 = vmatpush.bf16.msra.mxu0 %v406
    %426 = vmatpush.bf16.msra.mxu0 %v405
    %427 = vmatpush.bf16.msra.mxu0 %v404
    %428 = vmatmul.bf16.gmra.mxu0 %v351
    %v429 = vpop.f32.mrf.mxu0
    %v430 = vadd.f32 %v370, %v429
    %v431 = vpop.f32.mrf.mxu0
    %432 = vdwg.mxu0
    %v433 = vld [vmem:[%s9] sm:$0x1]
    %v435 = vperm.slane %v433, 0
    %v437 = vmul.f32 %v350, %v435
    %438 = vadd.xlane.f32.xlu0 %v437
    %v439 = vpop.xlane.xlu0 %438
    %v440 = vld [vmem:[#allocation2] sm:$0x1]
    %v442 = vperm.slane %v440, 0
    %v444 = vadd.f32 %v439, %v442
    %446 = vset.pattern.permute.xlu0 0
    %447 = vperm.xlu0 %446, %v444
    %v448 = vpop.permute.xlu0 %447
    %v450 = vadd.f32 %v430, %v448
    %451 = vst [vmem:[#allocation12] sm:$0xff] %v450
    %s452 = smul.u32 0, 8
    %v453 = vlaneseq
    %v454 = vshrl.u32 %v453, 7
    %v455 = vstv %s452
    %v456 = vadd.s32 %v455, %v454
    %v457 = vlaneseq
    %v458 = vand.u32 %v457, 127
    %vm459 = vcmp.lt.s32.totalorder %v456, 8
    %vm460 = vcmp.lt.s32.totalorder %v458, 8
    %vm461 = vmand %vm459, %vm460
    %v462 = vsel %vm461, %v430, 0.0
    %463 = vadd.xlane.f32.xlu0 %v462
    %v464 = vpop.xlane.xlu0 %463
    %v465 = vrot.slane %v464, 4
    %v466 = vadd.f32 %v464, %v465
    %v467 = vrot.slane %v466, 2
    %v468 = vadd.f32 %v466, %v467
    %v469 = vrot.slane %v468, 1
    %v470 = vadd.f32 %v468, %v469
    %s471 = vtos %v470
    %v472 = vstv %s471
    %473 = vst [vmem:[#allocation13] sm:$0xff] %v472
    // Predicated region
    $region66: #{tpu_custom_call.1} parent=1 // pred_check
      _
    $region67: #{tpu_custom_call.1} parent=1 // pred_check_branch
      %475 = sbr.rel (0) target = $region69
    $region68: #{tpu_custom_call.1} parent=1 // pred_region
      %477 = vsyncadd [#allocation5], 0
      %s479 = sshll.u32 [#allocation12], 4
      %s480 = int_to_ptr.vmem [resolvable:$true] %s479
      %s481 = sshll.u32 %s11, 4
      %s482 = int_to_ptr.hbm [resolvable:$true] %s481
      %484 = dma.vmem_to_hbm [thread:$0]  %s480, 128, %s482, [#allocation5]
    $region69: #{tpu_custom_call.1} parent=1 // pred_fallthru
      _
    // Predicated region
    $region70: #{tpu_custom_call.1} parent=1 // pred_check
      _
    $region71: #{tpu_custom_call.1} parent=1 // pred_check_branch
      %486 = sbr.rel (0) target = $region73
    $region72: #{tpu_custom_call.1} parent=1 // pred_region
      %488 = vsyncadd [#allocation14], 0
      %s490 = sshll.u32 [#allocation13], 4
      %s491 = int_to_ptr.vmem [resolvable:$true] %s490
      %s492 = sshll.u32 %s12, 4
      %s493 = int_to_ptr.hbm [resolvable:$true] %s492
      %495 = dma.vmem_to_hbm [thread:$0]  %s491, 128, %s493, [#allocation14]
    $region73: #{tpu_custom_call.1} parent=1 // pred_fallthru
      _
    // Predicated region
    $region74: #{tpu_custom_call.1} parent=1 // pred_check
      _
    $region75: #{tpu_custom_call.1} parent=1 // pred_check_branch
      %497 = sbr.rel (0) target = $region77
    $region76: #{tpu_custom_call.1} parent=1 // pred_region
      %499 = dma.done [#allocation5], 128
    $region77: #{tpu_custom_call.1} parent=1 // pred_fallthru
      _
    // Predicated region
    $region78: #{tpu_custom_call.1} parent=1 // pred_check
      _
    $region79: #{tpu_custom_call.1} parent=1 // pred_check_branch
      %501 = sbr.rel (0) target = $region81
    $region80: #{tpu_custom_call.1} parent=1 // pred_region
      %503 = dma.done [#allocation14], 128
    $region81: #{tpu_custom_call.1} parent=1 // pred_fallthru
      _
    %504 = vsyncpa [#allocation4], 1
    %505 = vsyncpa [#allocation7], 1
    %506 = vsyncpa [#allocation10], 1
    %507 = vsyncpa [#allocation5], 1
    %508 = vsyncpa [#allocation14], 1

</llo_original>
